<compile_context>
chip_gen: v6e
topology: v6e:2x2x1
jax: 0.10.0
libtpu: 0.0.40
codegen_flags: <defaults>
</compile_context>

<pallas_src>
import functools

import jax
import jax.numpy as jnp
from jax.experimental import pallas as pl
from jax.experimental.pallas import tpu as pltpu


def conv1d_same_kernel(x_ref, w_ref, o_ref, *, kernel_size, fuse_taps):
    """'Same'-padding, bias-free Conv1d for one batch element.

    x_ref : (S, H_in)                        one input sequence          (VMEM)
    w_ref : (K*H_in, H_out) if fuse_taps     fused weights, row=k*H_in+i (VMEM)
            (K, H_in, H_out) otherwise       per-tap weights             (VMEM)
    o_ref : (S, H_out)                       one output sequence         (VMEM)
    """
    S, _ = x_ref.shape
    K = kernel_size
    pad = (K - 1) // 2

    x = x_ref[...]
    # Row index within the sequence; only used to zero the <= pad circularly
    # wrapped rows of each rolled tap (this IS the "same" zero padding).
    t = jax.lax.broadcasted_iota(jnp.int32, (S, 1), 0)

    def tap(d):
        if d == 0:
            return x                                        # centre tap: no roll, no mask
        shifted = pltpu.roll(x, shift=(-d) % S, axis=0)     # XLU sublane rotate
        valid = jnp.logical_and(t + d >= 0, t + d < S)      # only |d| rows are invalid
        return jnp.where(valid, shifted, jnp.zeros_like(shifted))

    if fuse_taps:
        # Small H_in: im2col slab (S, K*H_in) -> single MXU matmul.
        xcol = jnp.concatenate([tap(k - pad) for k in range(K)], axis=-1)
        out = jnp.dot(xcol, w_ref[...], preferred_element_type=jnp.float32)
    else:
        # Large H_in: K accumulated matmuls; no K-times im2col slab in VMEM.
        out = jnp.dot(tap(-pad), w_ref[0], preferred_element_type=jnp.float32)
        for k in range(1, K):
            out += jnp.dot(tap(k - pad), w_ref[k],
                           preferred_element_type=jnp.float32)

    o_ref[...] = out.astype(o_ref.dtype)


def cnn_forward(x, weight, *, compute_dtype=None):
    """x: (B, S, H); weight: (H_out, H_in, K) in PyTorch Conv1d layout (no bias)."""
    B, S, H = x.shape
    H_out, H_in, K = weight.shape
    assert H_in == H, "Conv1d in_channels must match hidden size"
    assert K % 2 == 1, "'same' padding pad=(K-1)//2 only matches PyTorch for odd K"
    pad = (K - 1) // 2
    assert pad < S, "kernel taps must not exceed the sequence length"

    # bf16 matmul inputs (f32 accumulation) at production widths: big MXU win on
    # v6e/v7x and halves HBM/VMEM bytes. Tiny widths stay in the input dtype
    # (latency-dominated anyway; keeps the f32 reference check tight).
    if compute_dtype is None:
        compute_dtype = jnp.bfloat16 if H_in >= 128 else x.dtype

    # im2col only where it is needed to fill the MXU contraction dimension.
    fuse_taps = H_in < 128

    # Weight layout hoisted out of the kernel:
    # (H_out, H_in, K) -> (K, H_in, H_out); for the im2col path flattened to
    # (K*H_in, H_out) with row index k*H_in + i matching the im2col lane order.
    w_taps = jnp.transpose(weight, (2, 1, 0)).astype(compute_dtype)
    if fuse_taps:
        w_arg = w_taps.reshape(K * H_in, H_out)
        w_spec = pl.BlockSpec((K * H_in, H_out), lambda b: (0, 0))
    else:
        w_arg = w_taps
        w_spec = pl.BlockSpec((K, H_in, H_out), lambda b: (0, 0, 0))

    x_arg = x.astype(compute_dtype)

    kernel = functools.partial(conv1d_same_kernel, kernel_size=K,
                               fuse_taps=fuse_taps)

    itemsize = jnp.dtype(compute_dtype).itemsize
    cost = pl.CostEstimate(
        flops=2 * B * S * K * H_in * H_out,
        transcendentals=0,
        bytes_accessed=(B * S * H_in + K * H_in * H_out) * itemsize
        + B * S * H_out * jnp.dtype(x.dtype).itemsize,
    )

    out = pl.pallas_call(
        kernel,
        out_shape=jax.ShapeDtypeStruct((B, S, H_out), x.dtype),
        grid=(B,),
        in_specs=[
            # One full sequence per grid step; batch dim squeezed out of the ref.
            pl.BlockSpec((None, S, H_in), lambda b: (b, 0, 0)),
            # Constant index_map -> weight stays resident in VMEM across steps.
            w_spec,
        ],
        out_specs=pl.BlockSpec((None, S, H_out), lambda b: (b, 0, 0)),
        compiler_params=pltpu.CompilerParams(
            # Independent batch elements: shards across v7x's two TensorCores
            # and lets Pallas double-buffer the per-step DMAs.
            dimension_semantics=("parallel",),
        ),
        cost_estimate=cost,
    )(x_arg, w_arg)

    return out


def _reference(x, weight):
    # Pure-JAX reference: same math as torch.nn.Conv1d(bias=False, padding=pad)
    # applied to x.transpose(1, 2) and transposed back.
    pad = (weight.shape[2] - 1) // 2
    x_ncw = jnp.transpose(x, (0, 2, 1))
    y = jax.lax.conv_general_dilated(
        x_ncw, weight,
        window_strides=(1,), padding=[(pad, pad)],
        dimension_numbers=("NCH", "OIH", "NCH"),
    )
    return jnp.transpose(y, (0, 2, 1))


if __name__ == "__main__":
    # config = {'hidden_size': 32, 'kernel_size': 3}
    B, S, H, K = 2, 8, 32, 3

    key = jax.random.PRNGKey(0)
    kx, kw = jax.random.split(key)
    x = jax.random.normal(kx, (B, S, H), dtype=jnp.float32)
    # Deterministic "Conv1d" weight, PyTorch layout (out_ch, in_ch, K), no bias.
    weight = jax.random.normal(kw, (H, H, K), dtype=jnp.float32) * 0.1

    out = jax.block_until_ready(cnn_forward(x, weight))

    ref = _reference(x, weight)
    assert out.shape == (B, S, H)
    assert jnp.allclose(out, ref, atol=1e-4, rtol=1e-4), "mismatch vs reference"

    print("KERNEL_OK")
</pallas_src>

<mosaic_0001>
module attributes {stable_mosaic.version = 11 : i64} {
  func.func @conv1d_same_kernel(%arg0: i32, %arg1: memref<1x8x32xf32, #tpu.memory_space<vmem>>, %arg2: memref<96x32xf32, #tpu.memory_space<vmem>>, %arg3: memref<1x8x32xf32, #tpu.memory_space<vmem>>) attributes {dimension_semantics = [#tpu.dimension_semantics<parallel>], iteration_bounds = array<i64: 2>, scalar_prefetch = 0 : i64, scratch_operands = 0 : i64, tpu.core_type = #tpu.core_type<tc>, window_params = [{transform_indices = @transform_0, window_bounds = array<i64: 1, 8, 32>}, {pipeline_mode = #tpu.pipeline_mode<synchronous>, transform_indices = @transform_1, window_bounds = array<i64: 96, 32>}, {transform_indices = @transform_2, window_bounds = array<i64: 1, 8, 32>}]} {
    %c0 = arith.constant 0 : index
    %c0_0 = arith.constant 0 : index
    %c0_1 = arith.constant 0 : index
    %0 = vector.load %arg1[%c0, %c0_0, %c0_1] : memref<1x8x32xf32, #tpu.memory_space<vmem>>, vector<1x8x32xf32>
    %1 = vector.shape_cast %0 : vector<1x8x32xf32> to vector<8x32xf32>
    %2 = tpu.iota {dimensions = array<i32: 0>} : vector<8x1xi32>
    %c1_i32 = arith.constant 1 : i32
    %3 = tpu.dynamic_rotate %1 by %c1_i32 dim 0 : vector<8x32xf32>, i32 -> vector<8x32xf32>
    %c-1_i32 = arith.constant -1 : i32
    %4 = vector.broadcast %c-1_i32 : i32 to vector<8x1xi32>
    %5 = arith.addi %2, %4 : vector<8x1xi32>
    %c0_i32 = arith.constant 0 : i32
    %6 = vector.broadcast %c0_i32 : i32 to vector<8x1xi32>
    %7 = arith.cmpi sge, %5, %6 : vector<8x1xi32>
    %c-1_i32_2 = arith.constant -1 : i32
    %8 = vector.broadcast %c-1_i32_2 : i32 to vector<8x1xi32>
    %9 = arith.addi %2, %8 : vector<8x1xi32>
    %c8_i32 = arith.constant 8 : i32
    %10 = vector.broadcast %c8_i32 : i32 to vector<8x1xi32>
    %11 = arith.cmpi slt, %9, %10 : vector<8x1xi32>
    %12 = arith.andi %7, %11 : vector<8x1xi1>
    %cst = arith.constant 0.000000e+00 : f32
    %13 = vector.broadcast %cst : f32 to vector<8x32xf32>
    %14 = vector.shape_cast %12 : vector<8x1xi1> to vector<8x1xi1>
    %15 = vector.broadcast %14 : vector<8x1xi1> to vector<8x32xi1>
    %16 = arith.select %15, %3, %13 : vector<8x32xi1>, vector<8x32xf32>
    %c7_i32 = arith.constant 7 : i32
    %17 = tpu.dynamic_rotate %1 by %c7_i32 dim 0 : vector<8x32xf32>, i32 -> vector<8x32xf32>
    %c1_i32_3 = arith.constant 1 : i32
    %18 = vector.broadcast %c1_i32_3 : i32 to vector<8x1xi32>
    %19 = arith.addi %2, %18 : vector<8x1xi32>
    %c0_i32_4 = arith.constant 0 : i32
    %20 = vector.broadcast %c0_i32_4 : i32 to vector<8x1xi32>
    %21 = arith.cmpi sge, %19, %20 : vector<8x1xi32>
    %c1_i32_5 = arith.constant 1 : i32
    %22 = vector.broadcast %c1_i32_5 : i32 to vector<8x1xi32>
    %23 = arith.addi %2, %22 : vector<8x1xi32>
    %c8_i32_6 = arith.constant 8 : i32
    %24 = vector.broadcast %c8_i32_6 : i32 to vector<8x1xi32>
    %25 = arith.cmpi slt, %23, %24 : vector<8x1xi32>
    %26 = arith.andi %21, %25 : vector<8x1xi1>
    %cst_7 = arith.constant 0.000000e+00 : f32
    %27 = vector.broadcast %cst_7 : f32 to vector<8x32xf32>
    %28 = vector.shape_cast %26 : vector<8x1xi1> to vector<8x1xi1>
    %29 = vector.broadcast %28 : vector<8x1xi1> to vector<8x32xi1>
    %30 = arith.select %29, %17, %27 : vector<8x32xi1>, vector<8x32xf32>
    %31 = tpu.concatenate %16, %1, %30 in 1 : vector<8x32xf32>, vector<8x32xf32>, vector<8x32xf32> -> vector<8x96xf32>
    %c0_8 = arith.constant 0 : index
    %c0_9 = arith.constant 0 : index
    %32 = vector.load %arg2[%c0_8, %c0_9] : memref<96x32xf32, #tpu.memory_space<vmem>>, vector<96x32xf32>
    %cst_10 = arith.constant dense<0.000000e+00> : vector<8x32xf32>
    %33 = tpu.matmul %31, %32, %cst_10 {dimension_numbers = #tpu.dot_dimension_numbers<[1], [0], [0], [1], [0, 0, 1, 1], [], []>} : vector<8x96xf32>, vector<96x32xf32>, vector<8x32xf32> -> vector<8x32xf32>
    %c0_11 = arith.constant 0 : index
    %c0_12 = arith.constant 0 : index
    %c0_13 = arith.constant 0 : index
    %34 = vector.load %arg3[%c0_11, %c0_12, %c0_13] : memref<1x8x32xf32, #tpu.memory_space<vmem>>, vector<1x8x32xf32>
    %35 = vector.shape_cast %34 : vector<1x8x32xf32> to vector<8x32xf32>
    %36 = vector.shape_cast %33 : vector<8x32xf32> to vector<1x8x32xf32>
    tpu.vector_store %arg3[%c0_11, %c0_12, %c0_13], %36 {strides = array<i32>} : memref<1x8x32xf32, #tpu.memory_space<vmem>>, vector<1x8x32xf32>,
    return
  }
  func.func @transform_0(%arg0: i32) -> (i32, i32, i32) {
    %c0_i32 = arith.constant 0 : i32
    %c0_i32_0 = arith.constant 0 : i32
    %c0_i32_1 = arith.constant 0 : i32
    return %arg0, %c0_i32, %c0_i32_0 : i32, i32, i32
  }
  func.func @transform_1(%arg0: i32) -> (i32, i32) {
    %c0_i32 = arith.constant 0 : i32
    %c0_i32_0 = arith.constant 0 : i32
    %c0_i32_1 = arith.constant 0 : i32
    return %c0_i32, %c0_i32_0 : i32, i32
  }
  func.func @transform_2(%arg0: i32) -> (i32, i32, i32) {
    %c0_i32 = arith.constant 0 : i32
    %c0_i32_0 = arith.constant 0 : i32
    %c0_i32_1 = arith.constant 0 : i32
    return %arg0, %c0_i32, %c0_i32_0 : i32, i32, i32
  }
}

</mosaic_0001>

<llo_original>
// kernel: tpu_custom_call.1
$region0: #{tpu_custom_call.1}
  #allocation0 [shape = 'u32[]', space=smem, size = 0x4, offset = 0x4, fixed_abs, tag = 'smem constant byte address 0x4 - core index']
  #allocation1 [shape = 'u32[144,128]{1,0:T(1,128)}', space=vmem, size = 0x12000, scoped, tag = 'internal scratch']
  %s0 = inlined_call_operand.vmem [shape: f32[2,8,32], index: 0, kind: input, shape index: {}]
  %s1 = inlined_call_operand.vmem [shape: f32[96,32], index: 1, kind: input, shape index: {}]
  %s2 = inlined_call_operand.hbm [shape: f32[2,8,32], index: 2, kind: output, shape index: {}]
  %s3 = sld [smem:[#allocation0]]
  $region41: #{tpu_custom_call.1} parent=0
    _
  %s5 = ssub.s32 1, %s3
  %s6 = scalar_select 0, %s5, %s3
  $region1: #{tpu_custom_call.1} parent=0
    #allocation2 [shape = 'u8[8192]{0}', space=vmem, size = 0x2000, scoped, tag = 'output window, operand 0']
    #allocation3 [shape = 's32[2]{0}', space=sflag, size = 0x8, scoped, tag = 'scoped memory for tpu_custom_call.1']
    %7 = vsyncpa [#allocation3], 0
    %s8 = scalar_lea.sflag [#allocation3], 1
    %9 = vsyncpa %s8, 0
    loop: start=0, step=1, limit=4
    $region2: #{tpu_custom_call.1} parent=1 // loop_pre_header
      _
    $region3: #{tpu_custom_call.1} parent=1 // loop_header
      %s11 = sphi 0, %s15
      %p12 = scmp.ge.s32.totalorder %s11, 4
      %s21 = sphi 0, %s23
      %s24 = sphi 0, %s21
      %s25 = sphi 0, %s24
      %s41 = sphi 0, %s25
      %s45 = sphi 0, %s45
      %s47 = sphi 0, %s45
      %s48 = sphi 0, %s47
      %s62 = sphi 0, %s48
      %s68 = sphi 0, %s70
      %s71 = sphi 0, %s68
      %s72 = sphi 0, %s71
      %s88 = sphi 0, %s72
    $region4: #{tpu_custom_call.1} parent=1 // loop_header_branch
      %14 = sbr.rel (%p12) target = $region8
    $region5: #{tpu_custom_call.1} parent=1 // loop_body
      %s16 = ssub.s32 %s11, 1
      %s17 = ssub.s32 %s11, 2
      %s18 = sadd.s32 %s11, 1
      %s19 = ssub.s32 %s11, %s18
      %p20 = scmp.eq.s32.totalorder %s19, 0
      %s22 = sadd.s32 %s21, 1
      %s23 = scalar_select %p20, %s21, %s22
      %p26 = pneg %p20
      %p27 = scmp.eq.s32.totalorder %s11, 1
      %p28 = por %p26, %p27
      %p29 = scmp.ne.s32.totalorder %s21, %s24
      %p30 = scmp.eq.s32.totalorder %s11, 0
      %p31 = por %p29, %p30
      %p32 = scmp.ne.s32.totalorder %s21, %s24
      %p33 = scmp.eq.s32.totalorder %s16, 1
      %p34 = por %p32, %p33
      %p35 = scmp.ne.s32.totalorder %s24, %s25
      %p36 = scmp.eq.s32.totalorder %s16, 0
      %p37 = por %p35, %p36
      %p38 = scmp.ne.s32.totalorder %s24, %s25
      %p39 = scmp.eq.s32.totalorder %s17, 1
      %p40 = por %p38, %p39
      %p42 = scmp.ne.s32.totalorder %s25, %s41
      %p43 = scmp.eq.s32.totalorder %s17, 0
      %p44 = por %p42, %p43
      %s46 = sadd.s32 %s45, 1
      %p49 = scmp.eq.s32.totalorder %s11, 1
      %p50 = scmp.ne.s32.totalorder %s45, %s47
      %p51 = scmp.eq.s32.totalorder %s11, 0
      %p52 = por %p50, %p51
      %p53 = scmp.ne.s32.totalorder %s45, %s47
      %p54 = scmp.eq.s32.totalorder %s16, 1
      %p55 = por %p53, %p54
      %p56 = scmp.ne.s32.totalorder %s47, %s48
      %p57 = scmp.eq.s32.totalorder %s16, 0
      %p58 = por %p56, %p57
      %p59 = scmp.ne.s32.totalorder %s47, %s48
      %p60 = scmp.eq.s32.totalorder %s17, 1
      %p61 = por %p59, %p60
      %p63 = scmp.ne.s32.totalorder %s48, %s62
      %p64 = scmp.eq.s32.totalorder %s17, 0
      %p65 = por %p63, %p64
      %s66 = ssub.s32 %s11, %s18
      %p67 = scmp.eq.s32.totalorder %s66, 0
      %s69 = sadd.s32 %s68, 1
      %s70 = scalar_select %p67, %s68, %s69
      %p73 = pneg %p67
      %p74 = scmp.eq.s32.totalorder %s11, 1
      %p75 = por %p73, %p74
      %p76 = scmp.ne.s32.totalorder %s68, %s71
      %p77 = scmp.eq.s32.totalorder %s11, 0
      %p78 = por %p76, %p77
      %p79 = scmp.ne.s32.totalorder %s68, %s71
      %p80 = scmp.eq.s32.totalorder %s16, 1
      %p81 = por %p79, %p80
      %p82 = scmp.ne.s32.totalorder %s71, %s72
      %p83 = scmp.eq.s32.totalorder %s16, 0
      %p84 = por %p82, %p83
      %p85 = scmp.ne.s32.totalorder %s71, %s72
      %p86 = scmp.eq.s32.totalorder %s17, 1
      %p87 = por %p85, %p86
      %p89 = scmp.ne.s32.totalorder %s72, %s88
      %p90 = scmp.eq.s32.totalorder %s17, 0
      %p91 = por %p89, %p90
      %p92 = scmp.le.s32.totalorder 1, %s11
      %p93 = scmp.lt.s32.totalorder %s11, 3
      %p94 = pnand %p92, %p93
      %p95 = pneg %p94
      // Predicated region
      $region9: #{tpu_custom_call.1} parent=5 // pred_check
        _
      $region10: #{tpu_custom_call.1} parent=5 // pred_check_branch
        %97 = sbr.rel (%p94) target = $region12
      $region11: #{tpu_custom_call.1} parent=5 // pred_region
        %s98 = ssub.s32 %s11, 1
        // Predicated region
        $region13: #{tpu_custom_call.1} parent=11 // pred_check
          %p99 = pneg %p58
        $region14: #{tpu_custom_call.1} parent=11 // pred_check_branch
          %101 = sbr.rel (%p99) target = $region16
        $region15: #{tpu_custom_call.1} parent=11 // pred_region
          _
        $region16: #{tpu_custom_call.1} parent=11 // pred_fallthru
          _
      $region12: #{tpu_custom_call.1} parent=5 // pred_fallthru
        _
      %p102 = scmp.lt.s32.totalorder %s11, 2
      // Predicated region
      $region17: #{tpu_custom_call.1} parent=5 // pred_check
        %p103 = pneg %p102
      $region18: #{tpu_custom_call.1} parent=5 // pred_check_branch
        %105 = sbr.rel (%p103) target = $region20
      $region19: #{tpu_custom_call.1} parent=5 // pred_region
        // Predicated region
        $region21: #{tpu_custom_call.1} parent=19 // pred_check
          %p106 = pneg %p31
        $region22: #{tpu_custom_call.1} parent=19 // pred_check_branch
          %108 = sbr.rel (%p106) target = $region24
        $region23: #{tpu_custom_call.1} parent=19 // pred_region
          %p109 = scmp.lt.s32.totalorder %s11, 1
          %s110 = scalar_select %p109, %s11, 1
          %s111 = smul.addr %s110, 8
          %s112 = scalar_lea.vmem %s0, %s111
        $region24: #{tpu_custom_call.1} parent=19 // pred_fallthru
          _
      $region20: #{tpu_custom_call.1} parent=5 // pred_fallthru
        _
      %p113 = scmp.le.s32.totalorder 1, %s11
      %p114 = scmp.lt.s32.totalorder %s11, 3
      %p115 = pnand %p113, %p114
      %p116 = pneg %p115
      // Predicated region
      $region25: #{tpu_custom_call.1} parent=5 // pred_check
        _
      $region26: #{tpu_custom_call.1} parent=5 // pred_check_branch
        %118 = sbr.rel (%p115) target = $region28
      $region27: #{tpu_custom_call.1} parent=5 // pred_region
        %s119 = ssub.s32 %s11, 1
        %p120 = scmp.lt.s32.totalorder %s16, 1
        %s121 = scalar_select %p120, %s16, 1
        %s122 = smul.addr %s121, 8
        %s123 = scalar_lea.vmem %s0, %s122
        %p124 = pneg %p37
        %p125 = pneg %p34
        %p126 = pneg %p58
        %p127 = pneg %p55
        %p128 = pneg %p84
        %p129 = pneg %p81
        %s130 = sand.u32 %s71, 1
        %s131 = scalar_lea.sflag [#allocation3], %s130
        %s132 = sand.u32 %s71, 1
        %s133 = smul.addr %s132, 8
        %s134 = scalar_lea.vmem [#allocation2], %s133
        %p135 = scmp.lt.s32.totalorder %s16, 1
        %s136 = scalar_select %p135, %s16, 1
        %s137 = smul.addr %s136, 8
        %s138 = scalar_lea.vmem %s0, %s137
        %v139 = vld [vmem:[%s138] sm:$0xff]
        %v140 = vlaneseq
        %v141 = vshrl.u32 %v140, 7
        %v142 = vrot.slane %v139, 7
        %v143 = vadd.s32 %v141, 4294967295
        %vm144 = vcmp.ge.s32.totalorder %v143, 0
        %vm145 = vcmp.lt.s32.totalorder %v143, 8
        %vm146 = vmand %vm144, %vm145
        %v147 = vsel %vm146, 1, 0
        %vm148 = vcmp.eq.s32.totalorder %v147, 1
        %v149 = vsel %vm148, %v142, 0.0
        %v150 = vrot.slane %v139, 1
        %v151 = vadd.s32 %v141, 1
        %vm152 = vcmp.ge.s32.totalorder %v151, 0
        %vm153 = vcmp.lt.s32.totalorder %v151, 8
        %vm154 = vmand %vm152, %vm153
        %v155 = vsel %vm154, 1, 0
        %vm156 = vcmp.eq.s32.totalorder %v155, 1
        %v157 = vsel %vm156, %v150, 0.0
        %159 = vrot.lane.b32.xlu0 %v139, 32
        %v160 = vpop.permute.xlu0 %159
        %163 = vrot.lane.b32.xlu0 %v157, 64
        %v164 = vpop.permute.xlu0 %163
        %vm166 = vcmask 261120
        %v167 = vsel %vm166, %v149, %v160
        %vm168 = vcmask 523264
        %v169 = vsel %vm168, %v167, %v164
        %v170 = vld [vmem:[%s1] sm:$0xff]
        %v171 = vld [vmem:[%s1 + $0x8] sm:$0xff]
        %v172 = vld [vmem:[%s1 + $0x10] sm:$0xff]
        %v173 = vld [vmem:[%s1 + $0x18] sm:$0xff]
        %v174 = vld [vmem:[%s1 + $0x20] sm:$0xff]
        %v175 = vld [vmem:[%s1 + $0x28] sm:$0xff]
        %v176 = vld [vmem:[%s1 + $0x30] sm:$0xff]
        %v177 = vld [vmem:[%s1 + $0x38] sm:$0xff]
        %v178 = vld [vmem:[%s1 + $0x40] sm:$0xff]
        %v179 = vld [vmem:[%s1 + $0x48] sm:$0xff]
        %v180 = vld [vmem:[%s1 + $0x50] sm:$0xff]
        %v181 = vld [vmem:[%s1 + $0x58] sm:$0xff]
        %vm182 = vcmask 785408
        %v184 = vsel %vm182, %v169, 0
        %186 = vmatprep.subr.mxu0 0.0
        %187 = vmatpush1.msra.mxu0 0.0
        %188 = vmatprep.subr.mxu0 0.0
        %189 = vmatpush1.msra.mxu0 0.0
        %190 = vmatprep.subr.mxu0 0.0
        %191 = vmatpush1.msra.mxu0 0.0
        %192 = vmatprep.subr.mxu0 0.0
        %193 = vmatpush1.msra.mxu0 0.0
        %194 = vmatprep.subr.mxu0 0.0
        %195 = vmatpush1.msra.mxu0 %v181
        %196 = vmatprep.subr.mxu0 0.0
        %197 = vmatpush1.msra.mxu0 %v180
        %198 = vmatprep.subr.mxu0 0.0
        %199 = vmatpush1.msra.mxu0 %v179
        %200 = vmatprep.subr.mxu0 0.0
        %201 = vmatpush1.msra.mxu0 %v178
        %202 = vmatprep.subr.mxu0 0.0
        %203 = vmatpush1.msra.mxu0 %v177
        %204 = vmatprep.subr.mxu0 0.0
        %205 = vmatpush1.msra.mxu0 %v176
        %206 = vmatprep.subr.mxu0 0.0
        %207 = vmatpush1.msra.mxu0 %v175
        %208 = vmatprep.subr.mxu0 0.0
        %209 = vmatpush1.msra.mxu0 %v174
        %210 = vmatprep.subr.mxu0 0.0
        %211 = vmatpush1.msra.mxu0 %v173
        %212 = vmatprep.subr.mxu0 0.0
        %213 = vmatpush1.msra.mxu0 %v172
        %214 = vmatprep.subr.mxu0 0.0
        %215 = vmatpush1.msra.mxu0 %v171
        %216 = vmatprep.subr.mxu0 0.0
        %217 = vmatpush1.msra.mxu0 %v170
        %218 = vmatprep.subr.mxu0 0.0
        %219 = vmatpush2.msra.mxu0 0.0
        %220 = vmatprep.subr.mxu0 0.0
        %221 = vmatpush2.msra.mxu0 0.0
        %222 = vmatprep.subr.mxu0 0.0
        %223 = vmatpush2.msra.mxu0 0.0
        %224 = vmatprep.subr.mxu0 0.0
        %225 = vmatpush2.msra.mxu0 0.0
        %226 = vmatprep.subr.mxu0 0.0
        %227 = vmatpush2.msra.mxu0 0.0
        %228 = vmatprep.subr.mxu0 0.0
        %229 = vmatpush2.msra.mxu0 0.0
        %230 = vmatprep.subr.mxu0 0.0
        %231 = vmatpush2.msra.mxu0 0.0
        %232 = vmatprep.subr.mxu0 0.0
        %233 = vmatpush2.msra.mxu0 0.0
        %234 = vmatprep.subr.mxu0 0.0
        %235 = vmatpush2.msra.mxu0 0.0
        %236 = vmatprep.subr.mxu0 0.0
        %237 = vmatpush2.msra.mxu0 0.0
        %238 = vmatprep.subr.mxu0 0.0
        %239 = vmatpush2.msra.mxu0 0.0
        %240 = vmatprep.subr.mxu0 0.0
        %241 = vmatpush2.msra.mxu0 0.0
        %242 = vmatprep.subr.mxu0 0.0
        %243 = vmatpush2.msra.mxu0 0.0
        %244 = vmatprep.subr.mxu0 0.0
        %245 = vmatpush2.msra.mxu0 0.0
        %246 = vmatprep.subr.mxu0 0.0
        %247 = vmatpush2.msra.mxu0 0.0
        %248 = vmatprep.subr.mxu0 0.0
        %249 = vmatpush2.msra.mxu0 0.0
        %250 = vmatprep.mubr.f32.mxu0 0.0
        %251 = vmatmul.mubr.f32.gmra.mxu0 %v184
        %v252 = vpop.f32.mrf.mxu0
        %v253 = vadd.f32 0.0, %v252
        %v254 = vpop.f32.mrf.mxu0
        %255 = vdwg.mxu0
        %256 = vst.msk [vmem:[%s134] sm:$0xff] %vm166, %v253
        %s257 = sand.u32 %s71, 1
        %s258 = scalar_lea.sflag [#allocation3], %s257
        %s259 = sand.u32 %s71, 1
        %s260 = smul.addr %s259, 8
        %s261 = scalar_lea.vmem [#allocation2], %s260
        // Predicated region
        $region29: #{tpu_custom_call.1} parent=27 // pred_check
          %p262 = pneg %p81
        $region30: #{tpu_custom_call.1} parent=27 // pred_check_branch
          %264 = sbr.rel (%p262) target = $region32
        $region31: #{tpu_custom_call.1} parent=27 // pred_region
          %s266 = ssub.s32 128, 128
          %267 = vsyncadd %s258, %s266
          %s268 = smul.addr %s16, 128
          %s269 = scalar_lea.hbm %s2, %s268
          %s271 = sshll.u32 %s261, 4
          %s272 = int_to_ptr.vmem [resolvable:$true] %s271
          %274 = dma.vmem_to_hbm [thread:$0]  %s272, 128, %s269, %s258
        $region32: #{tpu_custom_call.1} parent=27 // pred_fallthru
          _
      $region28: #{tpu_custom_call.1} parent=5 // pred_fallthru
        _
      %p275 = scmp.le.s32.totalorder 2, %s11
      // Predicated region
      $region33: #{tpu_custom_call.1} parent=5 // pred_check
        %p276 = pneg %p275
      $region34: #{tpu_custom_call.1} parent=5 // pred_check_branch
        %278 = sbr.rel (%p276) target = $region36
      $region35: #{tpu_custom_call.1} parent=5 // pred_region
        %s279 = ssub.s32 %s11, 2
        // Predicated region
        $region37: #{tpu_custom_call.1} parent=35 // pred_check
          %p280 = pneg %p87
        $region38: #{tpu_custom_call.1} parent=35 // pred_check_branch
          %282 = sbr.rel (%p280) target = $region40
        $region39: #{tpu_custom_call.1} parent=35 // pred_region
          %s283 = sand.u32 %s72, 1
          %s284 = scalar_lea.sflag [#allocation3], %s283
          %s285 = sand.u32 %s72, 1
          %s286 = smul.addr %s285, 8
          %s287 = scalar_lea.vmem [#allocation2], %s286
          %288 = dma.done %s284, 128
        $region40: #{tpu_custom_call.1} parent=35 // pred_fallthru
          _
      $region36: #{tpu_custom_call.1} parent=5 // pred_fallthru
        _
    $region6: #{tpu_custom_call.1} parent=1 // loop_footer
      %s15 = sadd.s32 1, %s11
    $region7: #{tpu_custom_call.1} parent=1 // loop_footer_branch
      %10 = sbr.rel target = $region3
    $region8: #{tpu_custom_call.1} parent=1 // loop_exit
      _
    %289 = vsyncpa [#allocation3], 1
    %s290 = scalar_lea.sflag [#allocation3], 1
    %291 = vsyncpa %s290, 1

</llo_original>
